<compile_context>
chip_gen: v7x
topology: tpu7x:2x2x1
jax: 0.10.0
libtpu: 0.0.40
codegen_flags: <defaults>
</compile_context>

<pallas_src>
import jax
import jax.numpy as jnp
from jax import lax
from jax.experimental import pallas as pl
from jax.experimental.pallas import tpu as pltpu

_NEG_SLOPE = 0.2


# --------------------------------- kernel ----------------------------------
def _resnet_block_kernel(x_ref, lh_ref, rh_ref, w1_ref, b1_ref, wsc_ref,
                         w2_ref, bsum_ref, o_ref):
    """One (C, tile_t) output tile.  Grid = (batch, time-tile); both parallel."""
    x = x_ref[0]               # (C, tile_t) raw input tile (shortcut + center tap)
    lh = lh_ref[0, 0]          # (C, d) columns immediately left of the tile
    rh = rh_ref[0, 0]          # (C, d) columns immediately right of the tile
    tile_t = x.shape[-1]
    d = lh.shape[-1]

    # LeakyReLU(0.2) on the raw tile and its halos (elementwise, VPU).
    a = jnp.where(x > 0, x, _NEG_SLOPE * x)
    al = jnp.where(lh > 0, lh, _NEG_SLOPE * lh)
    ar = jnp.where(rh > 0, rh, _NEG_SLOPE * rh)

    # Shifted tap inputs a(t-d) / a(t+d): halo columns + lane-shifted interior.
    a_left = jnp.concatenate([al, a[:, :tile_t - d]], axis=1)    # (C, tile_t)
    a_right = jnp.concatenate([a[:, d:], ar], axis=1)            # (C, tile_t)

    # Dilated k=3 conv as three accumulating MXU matmuls with f32 accumulation
    # (review: avoid the (3C, tile_t) concat temporary; MXU push count is
    #  irrelevant at these channel counts).
    h = jnp.dot(w1_ref[0], a_left, preferred_element_type=jnp.float32)
    h = h + jnp.dot(w1_ref[1], a, preferred_element_type=jnp.float32)
    h = h + jnp.dot(w1_ref[2], a_right, preferred_element_type=jnp.float32)
    h = h + b1_ref[...]
    h = jnp.where(h > 0, h, _NEG_SLOPE * h)                      # LeakyReLU(0.2)

    # Shortcut k=1 conv + second k=1 conv; biases pre-fused into bsum.
    y = jnp.dot(wsc_ref[...], x, preferred_element_type=jnp.float32)
    y = y + jnp.dot(w2_ref[...], h.astype(w2_ref.dtype),
                    preferred_element_type=jnp.float32)
    y = y + bsum_ref[...]
    o_ref[0] = y.astype(o_ref.dtype)


# --------------------------------- wrapper ----------------------------------
def _wn_weight(v, g):
    """Effective weight of torch.nn.utils.weight_norm on Conv1d (dim=0)."""
    norm = jnp.sqrt(jnp.sum(v * v, axis=(1, 2), keepdims=True))
    return g.reshape(-1, 1, 1) * v / norm


def _pick_tile_t(T, C, itemsize):
    """Largest 128-aligned tile dividing T, capped for vreg / VMEM pressure."""
    lane_cap = 2048 if itemsize <= 2 else 1024          # review items 1 & 6
    byte_cap = max(128, (2 << 20) // max(1, C * itemsize))
    cap = (min(lane_cap, byte_cap, T) // 128) * 128
    for cand in range(cap, 0, -128):
        if T % cand == 0:
            return cand
    # TODO(synk): masked partial-last-tile path so long non-128-multiple T does
    # not fall back to a single whole-row tile (v7x 64 MiB VMEM budget).
    return T


def resnet_block_pallas(x, params, dilation, *, tile_t=None, operand_dtype=None):
    """x: (B, C, T) in PyTorch NCW layout.  Returns (B, C, T)."""
    B, C, T = x.shape
    d = int(dilation)
    if d < 1:
        raise ValueError("dilation must be >= 1")
    if d >= T:
        raise ValueError(f"ReflectionPad1d({d}) requires T > dilation (T={T})")

    op_dtype = jnp.dtype(operand_dtype) if operand_dtype is not None else jnp.dtype(x.dtype)

    # Weight-norm reparameterization (done once, outside the kernel).
    w1_eff = _wn_weight(params["v1"], params["g1"])              # (C, C, 3)
    w1 = jnp.transpose(w1_eff, (2, 0, 1)).astype(op_dtype)       # (3, C, C) tap-major
    w2 = _wn_weight(params["v2"], params["g2"])[:, :, 0].astype(op_dtype)
    wsc = _wn_weight(params["vsc"], params["gsc"])[:, :, 0].astype(op_dtype)
    b1 = params["b1"].reshape(C, 1).astype(jnp.float32)
    bsum = (params["b2"] + params["bsc"]).reshape(C, 1).astype(jnp.float32)  # fused k=1 bias

    if tile_t is None:
        tile_t = _pick_tile_t(T, C, op_dtype.itemsize)
    assert T % tile_t == 0, (T, tile_t)
    assert tile_t >= d, (tile_t, d)
    n_t = T // tile_t

    x_op = x.astype(op_dtype)

    # Tiny per-tile halo arrays (B, n_t, C, d).  These replace the full-copy
    # reflect pad: only 2*d columns per tile are gathered here, so the kernel
    # reads the raw input exactly once from HBM.
    left_refl = x_op[:, :, 1:d + 1][:, :, ::-1]                  # x[d] ... x[1]
    right_refl = x_op[:, :, T - 1 - d:T - 1][:, :, ::-1]         # x[T-2] ... x[T-1-d]
    if n_t > 1:
        xr = x_op.reshape(B, C, n_t, tile_t)
        lhalo = jnp.concatenate(
            [left_refl[:, :, None, :], xr[:, :, :-1, tile_t - d:]], axis=2)
        rhalo = jnp.concatenate(
            [xr[:, :, 1:, :d], right_refl[:, :, None, :]], axis=2)
    else:
        lhalo = left_refl[:, :, None, :]
        rhalo = right_refl[:, :, None, :]
    lhalo = jnp.transpose(lhalo, (0, 2, 1, 3))                   # (B, n_t, C, d)
    rhalo = jnp.transpose(rhalo, (0, 2, 1, 3))

    # VMEM budget from the actual footprint, clamped well below v7x's 64 MiB.
    blk_bytes = C * tile_t * op_dtype.itemsize
    est = (4 * blk_bytes                         # double-buffered in + out blocks
           + 8 * C * tile_t * 4                  # in-kernel f32 temporaries
           + 5 * C * C * op_dtype.itemsize       # weights
           + 4 * C * d * op_dtype.itemsize + 2 * C * 4)
    vmem_limit = int(min(48 * 1024 * 1024, max(4 * est, 16 * 1024 * 1024)))

    return pl.pallas_call(
        _resnet_block_kernel,
        out_shape=jax.ShapeDtypeStruct((B, C, T), op_dtype),
        grid_spec=pltpu.PrefetchScalarGridSpec(
            num_scalar_prefetch=0,
            grid=(B, n_t),
            in_specs=[
                pl.BlockSpec((1, C, tile_t), lambda b, j: (b, 0, j)),   # x tile
                pl.BlockSpec((1, 1, C, d), lambda b, j: (b, j, 0, 0)),  # left halo
                pl.BlockSpec((1, 1, C, d), lambda b, j: (b, j, 0, 0)),  # right halo
                pl.BlockSpec((3, C, C), lambda b, j: (0, 0, 0)),        # k=3 tap weights
                pl.BlockSpec((C, 1), lambda b, j: (0, 0)),              # b1
                pl.BlockSpec((C, C), lambda b, j: (0, 0)),              # shortcut weight
                pl.BlockSpec((C, C), lambda b, j: (0, 0)),              # second k=1 weight
                pl.BlockSpec((C, 1), lambda b, j: (0, 0)),              # fused bias b2+bsc
            ],
            out_specs=pl.BlockSpec((1, C, tile_t), lambda b, j: (b, 0, j)),
        ),
        compiler_params=pltpu.CompilerParams(
            dimension_semantics=("parallel", "parallel"),   # megacore on B and T tiles
            vmem_limit_bytes=vmem_limit,
        ),
    )(x_op, lhalo, rhalo, w1, b1, wsc, w2, bsum)


# ----------------------------- pure-JAX reference -----------------------------
def _conv1d_ncw(x, w, b, dilation=1):
    y = lax.conv_general_dilated(
        x, w, window_strides=(1,), padding="VALID",
        rhs_dilation=(dilation,), dimension_numbers=("NCH", "OIH", "NCH"))
    return y + b[None, :, None]


def resnet_block_ref(x, params, dilation):
    w1 = _wn_weight(params["v1"], params["g1"])
    w2 = _wn_weight(params["v2"], params["g2"])
    wsc = _wn_weight(params["vsc"], params["gsc"])

    sc = _conv1d_ncw(x, wsc, params["bsc"], 1)

    h = jax.nn.leaky_relu(x, _NEG_SLOPE)
    h = jnp.pad(h, ((0, 0), (0, 0), (dilation, dilation)), mode="reflect")
    h = _conv1d_ncw(h, w1, params["b1"], dilation)
    h = jax.nn.leaky_relu(h, _NEG_SLOPE)
    h = _conv1d_ncw(h, w2, params["b2"], 1)
    return sc + h


# ------------------------------------ main ------------------------------------
if __name__ == "__main__":
    key = jax.random.PRNGKey(0)
    keys = jax.random.split(key, 11)

    B, C = 2, 8
    dilation = 2

    params = {
        # WNConv1d(dim, dim, kernel_size=3, dilation=dilation)
        "v1": jax.random.normal(keys[1], (C, C, 3), jnp.float32) * 0.2,
        "g1": jax.random.normal(keys[2], (C,), jnp.float32) * 0.5 + 1.0,
        "b1": jax.random.normal(keys[3], (C,), jnp.float32) * 0.1,
        # WNConv1d(dim, dim, kernel_size=1)
        "v2": jax.random.normal(keys[4], (C, C, 1), jnp.float32) * 0.2,
        "g2": jax.random.normal(keys[5], (C,), jnp.float32) * 0.5 + 1.0,
        "b2": jax.random.normal(keys[6], (C,), jnp.float32) * 0.1,
        # shortcut WNConv1d(dim, dim, kernel_size=1)
        "vsc": jax.random.normal(keys[7], (C, C, 1), jnp.float32) * 0.2,
        "gsc": jax.random.normal(keys[8], (C,), jnp.float32) * 0.5 + 1.0,
        "bsc": jax.random.normal(keys[9], (C,), jnp.float32) * 0.1,
    }

    # Case 1: multi-tile time axis (interior halos come from neighbor tiles).
    T1 = 512
    x1 = jax.random.normal(keys[0], (B, C, T1), jnp.float32)
    ref1 = jax.block_until_ready(resnet_block_ref(x1, params, dilation))

    out1 = jax.block_until_ready(resnet_block_pallas(x1, params, dilation, tile_t=128))
    assert out1.shape == (B, C, T1), out1.shape
    assert jnp.allclose(out1, ref1, atol=1e-4, rtol=1e-4), float(
        jnp.max(jnp.abs(out1 - ref1)))

    # Case 2: default (large) tile -> single tile per row, reflection at both edges.
    out1b = jax.block_until_ready(resnet_block_pallas(x1, params, dilation))
    assert jnp.allclose(out1b, ref1, atol=1e-4, rtol=1e-4), float(
        jnp.max(jnp.abs(out1b - ref1)))

    # Case 3: short sequence (not a multiple of 128) with a different dilation.
    T2, dil2 = 24, 3
    x2 = jax.random.normal(keys[10], (B, C, T2), jnp.float32)
    out2 = jax.block_until_ready(resnet_block_pallas(x2, params, dil2))
    ref2 = jax.block_until_ready(resnet_block_ref(x2, params, dil2))
    assert out2.shape == (B, C, T2), out2.shape
    assert jnp.allclose(out2, ref2, atol=1e-4, rtol=1e-4), float(
        jnp.max(jnp.abs(out2 - ref2)))

    # Case 4: bf16 operands with f32 MXU accumulation (halves HBM/VMEM traffic);
    # loose tolerance vs. the f32 reference.
    out_bf = jax.block_until_ready(
        resnet_block_pallas(x1, params, dilation, operand_dtype=jnp.bfloat16))
    assert out_bf.shape == (B, C, T1) and out_bf.dtype == jnp.bfloat16
    assert float(jnp.max(jnp.abs(out_bf.astype(jnp.float32) - ref1))) < 0.15

    print("KERNEL_OK")
</pallas_src>

<mosaic_0001>
module attributes {stable_mosaic.version = 11 : i64} {
  func.func @_resnet_block_kernel(%arg0: i32, %arg1: i32, %arg2: memref<1x8x128xf32, #tpu.memory_space<vmem>>, %arg3: memref<1x1x8x2xf32, #tpu.memory_space<vmem>>, %arg4: memref<1x1x8x2xf32, #tpu.memory_space<vmem>>, %arg5: memref<3x8x8xf32, #tpu.memory_space<vmem>>, %arg6: memref<8x1xf32, #tpu.memory_space<vmem>>, %arg7: memref<8x8xf32, #tpu.memory_space<vmem>>, %arg8: memref<8x8xf32, #tpu.memory_space<vmem>>, %arg9: memref<8x1xf32, #tpu.memory_space<vmem>>, %arg10: memref<1x8x128xf32, #tpu.memory_space<vmem>>) attributes {dimension_semantics = [#tpu.dimension_semantics<parallel>, #tpu.dimension_semantics<parallel>], iteration_bounds = array<i64: 2, 4>, scalar_prefetch = 0 : i64, scratch_operands = 0 : i64, tpu.core_type = #tpu.core_type<tc>, window_params = [{transform_indices = @transform_0, window_bounds = array<i64: 1, 8, 128>}, {transform_indices = @transform_1, window_bounds = array<i64: 1, 1, 8, 2>}, {transform_indices = @transform_2, window_bounds = array<i64: 1, 1, 8, 2>}, {pipeline_mode = #tpu.pipeline_mode<synchronous>, transform_indices = @transform_3, window_bounds = array<i64: 3, 8, 8>}, {pipeline_mode = #tpu.pipeline_mode<synchronous>, transform_indices = @transform_4, window_bounds = array<i64: 8, 1>}, {pipeline_mode = #tpu.pipeline_mode<synchronous>, transform_indices = @transform_5, window_bounds = array<i64: 8, 8>}, {pipeline_mode = #tpu.pipeline_mode<synchronous>, transform_indices = @transform_6, window_bounds = array<i64: 8, 8>}, {pipeline_mode = #tpu.pipeline_mode<synchronous>, transform_indices = @transform_7, window_bounds = array<i64: 8, 1>}, {transform_indices = @transform_8, window_bounds = array<i64: 1, 8, 128>}]} {
    %c0 = arith.constant 0 : index
    %c0_0 = arith.constant 0 : index
    %c0_1 = arith.constant 0 : index
    %0 = vector.load %arg2[%c0, %c0_0, %c0_1] : memref<1x8x128xf32, #tpu.memory_space<vmem>>, vector<1x8x128xf32>
    %1 = vector.shape_cast %0 : vector<1x8x128xf32> to vector<8x128xf32>
    %c0_2 = arith.constant 0 : index
    %c0_3 = arith.constant 0 : index
    %c0_4 = arith.constant 0 : index
    %c0_5 = arith.constant 0 : index
    %2 = vector.load %arg3[%c0_2, %c0_3, %c0_4, %c0_5] : memref<1x1x8x2xf32, #tpu.memory_space<vmem>>, vector<1x1x8x2xf32>
    %3 = vector.shape_cast %2 : vector<1x1x8x2xf32> to vector<8x2xf32>
    %c0_6 = arith.constant 0 : index
    %c0_7 = arith.constant 0 : index
    %c0_8 = arith.constant 0 : index
    %c0_9 = arith.constant 0 : index
    %4 = vector.load %arg4[%c0_6, %c0_7, %c0_8, %c0_9] : memref<1x1x8x2xf32, #tpu.memory_space<vmem>>, vector<1x1x8x2xf32>
    %5 = vector.shape_cast %4 : vector<1x1x8x2xf32> to vector<8x2xf32>
    %cst = arith.constant 0.000000e+00 : f32
    %6 = vector.broadcast %cst : f32 to vector<8x128xf32>
    %7 = arith.cmpf ogt, %1, %6 : vector<8x128xf32>
    %cst_10 = arith.constant 2.000000e-01 : f32
    %8 = vector.broadcast %cst_10 : f32 to vector<8x128xf32>
    %9 = arith.mulf %8, %1 : vector<8x128xf32>
    %10 = arith.select %7, %1, %9 : vector<8x128xi1>, vector<8x128xf32>
    %cst_11 = arith.constant 0.000000e+00 : f32
    %11 = vector.broadcast %cst_11 : f32 to vector<8x2xf32>
    %12 = arith.cmpf ogt, %3, %11 : vector<8x2xf32>
    %cst_12 = arith.constant 2.000000e-01 : f32
    %13 = vector.broadcast %cst_12 : f32 to vector<8x2xf32>
    %14 = arith.mulf %13, %3 : vector<8x2xf32>
    %15 = arith.select %12, %3, %14 : vector<8x2xi1>, vector<8x2xf32>
    %cst_13 = arith.constant 0.000000e+00 : f32
    %16 = vector.broadcast %cst_13 : f32 to vector<8x2xf32>
    %17 = arith.cmpf ogt, %5, %16 : vector<8x2xf32>
    %cst_14 = arith.constant 2.000000e-01 : f32
    %18 = vector.broadcast %cst_14 : f32 to vector<8x2xf32>
    %19 = arith.mulf %18, %5 : vector<8x2xf32>
    %20 = arith.select %17, %5, %19 : vector<8x2xi1>, vector<8x2xf32>
    %21 = vector.extract_strided_slice %10 {offsets = [0, 0], sizes = [8, 126], strides = [1, 1]} : vector<8x128xf32> to vector<8x126xf32>
    %22 = tpu.concatenate %15, %21 in 1 : vector<8x2xf32>, vector<8x126xf32> -> vector<8x128xf32>
    %23 = vector.extract_strided_slice %10 {offsets = [0, 2], sizes = [8, 126], strides = [1, 1]} : vector<8x128xf32> to vector<8x126xf32>
    %24 = tpu.concatenate %23, %20 in 1 : vector<8x126xf32>, vector<8x2xf32> -> vector<8x128xf32>
    %c0_15 = arith.constant 0 : index
    %c0_16 = arith.constant 0 : index
    %c0_17 = arith.constant 0 : index
    %25 = vector.load %arg5[%c0_15, %c0_16, %c0_17] : memref<3x8x8xf32, #tpu.memory_space<vmem>>, vector<1x8x8xf32>
    %26 = vector.shape_cast %25 : vector<1x8x8xf32> to vector<8x8xf32>
    %cst_18 = arith.constant dense<0.000000e+00> : vector<8x128xf32>
    %27 = tpu.matmul %26, %22, %cst_18 {dimension_numbers = #tpu.dot_dimension_numbers<[1], [0], [0], [1], [0, 0, 1, 1], [], []>} : vector<8x8xf32>, vector<8x128xf32>, vector<8x128xf32> -> vector<8x128xf32>
    %c1 = arith.constant 1 : index
    %c0_19 = arith.constant 0 : index
    %c0_20 = arith.constant 0 : index
    %28 = vector.load %arg5[%c1, %c0_19, %c0_20] : memref<3x8x8xf32, #tpu.memory_space<vmem>>, vector<1x8x8xf32>
    %29 = vector.shape_cast %28 : vector<1x8x8xf32> to vector<8x8xf32>
    %cst_21 = arith.constant dense<0.000000e+00> : vector<8x128xf32>
    %30 = tpu.matmul %29, %10, %cst_21 {dimension_numbers = #tpu.dot_dimension_numbers<[1], [0], [0], [1], [0, 0, 1, 1], [], []>} : vector<8x8xf32>, vector<8x128xf32>, vector<8x128xf32> -> vector<8x128xf32>
    %31 = arith.addf %27, %30 : vector<8x128xf32>
    %c2 = arith.constant 2 : index
    %c0_22 = arith.constant 0 : index
    %c0_23 = arith.constant 0 : index
    %32 = vector.load %arg5[%c2, %c0_22, %c0_23] : memref<3x8x8xf32, #tpu.memory_space<vmem>>, vector<1x8x8xf32>
    %33 = vector.shape_cast %32 : vector<1x8x8xf32> to vector<8x8xf32>
    %cst_24 = arith.constant dense<0.000000e+00> : vector<8x128xf32>
    %34 = tpu.matmul %33, %24, %cst_24 {dimension_numbers = #tpu.dot_dimension_numbers<[1], [0], [0], [1], [0, 0, 1, 1], [], []>} : vector<8x8xf32>, vector<8x128xf32>, vector<8x128xf32> -> vector<8x128xf32>
    %35 = arith.addf %31, %34 : vector<8x128xf32>
    %c0_25 = arith.constant 0 : index
    %c0_26 = arith.constant 0 : index
    %36 = vector.load %arg6[%c0_25, %c0_26] : memref<8x1xf32, #tpu.memory_space<vmem>>, vector<8x1xf32>
    %37 = vector.broadcast %36 : vector<8x1xf32> to vector<8x128xf32>
    %38 = arith.addf %35, %37 : vector<8x128xf32>
    %cst_27 = arith.constant 0.000000e+00 : f32
    %39 = vector.broadcast %cst_27 : f32 to vector<8x128xf32>
    %40 = arith.cmpf ogt, %38, %39 : vector<8x128xf32>
    %cst_28 = arith.constant 2.000000e-01 : f32
    %41 = vector.broadcast %cst_28 : f32 to vector<8x128xf32>
    %42 = arith.mulf %41, %38 : vector<8x128xf32>
    %43 = arith.select %40, %38, %42 : vector<8x128xi1>, vector<8x128xf32>
    %c0_29 = arith.constant 0 : index
    %c0_30 = arith.constant 0 : index
    %44 = vector.load %arg7[%c0_29, %c0_30] : memref<8x8xf32, #tpu.memory_space<vmem>>, vector<8x8xf32>
    %cst_31 = arith.constant dense<0.000000e+00> : vector<8x128xf32>
    %45 = tpu.matmul %44, %1, %cst_31 {dimension_numbers = #tpu.dot_dimension_numbers<[1], [0], [0], [1], [0, 0, 1, 1], [], []>} : vector<8x8xf32>, vector<8x128xf32>, vector<8x128xf32> -> vector<8x128xf32>
    %c0_32 = arith.constant 0 : index
    %c0_33 = arith.constant 0 : index
    %46 = vector.load %arg8[%c0_32, %c0_33] : memref<8x8xf32, #tpu.memory_space<vmem>>, vector<8x8xf32>
    %cst_34 = arith.constant dense<0.000000e+00> : vector<8x128xf32>
    %47 = tpu.matmul %46, %43, %cst_34 {dimension_numbers = #tpu.dot_dimension_numbers<[1], [0], [0], [1], [0, 0, 1, 1], [], []>} : vector<8x8xf32>, vector<8x128xf32>, vector<8x128xf32> -> vector<8x128xf32>
    %48 = arith.addf %45, %47 : vector<8x128xf32>
    %c0_35 = arith.constant 0 : index
    %c0_36 = arith.constant 0 : index
    %49 = vector.load %arg9[%c0_35, %c0_36] : memref<8x1xf32, #tpu.memory_space<vmem>>, vector<8x1xf32>
    %50 = vector.broadcast %49 : vector<8x1xf32> to vector<8x128xf32>
    %51 = arith.addf %48, %50 : vector<8x128xf32>
    %c0_37 = arith.constant 0 : index
    %c0_38 = arith.constant 0 : index
    %c0_39 = arith.constant 0 : index
    %52 = vector.load %arg10[%c0_37, %c0_38, %c0_39] : memref<1x8x128xf32, #tpu.memory_space<vmem>>, vector<1x8x128xf32>
    %53 = vector.shape_cast %52 : vector<1x8x128xf32> to vector<8x128xf32>
    %54 = vector.shape_cast %51 : vector<8x128xf32> to vector<1x8x128xf32>
    tpu.vector_store %arg10[%c0_37, %c0_38, %c0_39], %54 {strides = array<i32>} : memref<1x8x128xf32, #tpu.memory_space<vmem>>, vector<1x8x128xf32>,
    return
  }
  func.func @transform_0(%arg0: i32, %arg1: i32) -> (i32, i32, i32) {
    %c0_i32 = arith.constant 0 : i32
    %c0_i32_0 = arith.constant 0 : i32
    return %arg0, %c0_i32, %arg1 : i32, i32, i32
  }
  func.func @transform_1(%arg0: i32, %arg1: i32) -> (i32, i32, i32, i32) {
    %c0_i32 = arith.constant 0 : i32
    %c0_i32_0 = arith.constant 0 : i32
    %c0_i32_1 = arith.constant 0 : i32
    return %arg0, %arg1, %c0_i32, %c0_i32_0 : i32, i32, i32, i32
  }
  func.func @transform_2(%arg0: i32, %arg1: i32) -> (i32, i32, i32, i32) {
    %c0_i32 = arith.constant 0 : i32
    %c0_i32_0 = arith.constant 0 : i32
    %c0_i32_1 = arith.constant 0 : i32
    return %arg0, %arg1, %c0_i32, %c0_i32_0 : i32, i32, i32, i32
  }
  func.func @transform_3(%arg0: i32, %arg1: i32) -> (i32, i32, i32) {
    %c0_i32 = arith.constant 0 : i32
    %c0_i32_0 = arith.constant 0 : i32
    %c0_i32_1 = arith.constant 0 : i32
    %c0_i32_2 = arith.constant 0 : i32
    return %c0_i32, %c0_i32_0, %c0_i32_1 : i32, i32, i32
  }
  func.func @transform_4(%arg0: i32, %arg1: i32) -> (i32, i32) {
    %c0_i32 = arith.constant 0 : i32
    %c0_i32_0 = arith.constant 0 : i32
    %c0_i32_1 = arith.constant 0 : i32
    return %c0_i32, %c0_i32_0 : i32, i32
  }
  func.func @transform_5(%arg0: i32, %arg1: i32) -> (i32, i32) {
    %c0_i32 = arith.constant 0 : i32
    %c0_i32_0 = arith.constant 0 : i32
    %c0_i32_1 = arith.constant 0 : i32
    return %c0_i32, %c0_i32_0 : i32, i32
  }
  func.func @transform_6(%arg0: i32, %arg1: i32) -> (i32, i32) {
    %c0_i32 = arith.constant 0 : i32
    %c0_i32_0 = arith.constant 0 : i32
    %c0_i32_1 = arith.constant 0 : i32
    return %c0_i32, %c0_i32_0 : i32, i32
  }
  func.func @transform_7(%arg0: i32, %arg1: i32) -> (i32, i32) {
    %c0_i32 = arith.constant 0 : i32
    %c0_i32_0 = arith.constant 0 : i32
    %c0_i32_1 = arith.constant 0 : i32
    return %c0_i32, %c0_i32_0 : i32, i32
  }
  func.func @transform_8(%arg0: i32, %arg1: i32) -> (i32, i32, i32) {
    %c0_i32 = arith.constant 0 : i32
    %c0_i32_0 = arith.constant 0 : i32
    return %arg0, %c0_i32, %arg1 : i32, i32, i32
  }
}

</mosaic_0001>

<llo_original>
// kernel: tpu_custom_call.1
$region0: #{tpu_custom_call.1}
  #allocation0 [shape = 'u32[]', space=smem, size = 0x4, offset = 0x4, fixed_abs, tag = 'smem constant byte address 0x4 - core index']
  #allocation1 [shape = 'u32[144,128]{1,0:T(1,128)}', space=vmem, size = 0x12000, scoped, tag = 'internal scratch']
  %s0 = inlined_call_operand.vmem [shape: f32[2,8,512], index: 0, kind: input, shape index: {}]
  %s1 = inlined_call_operand.vmem [shape: f32[2,4,8,2], index: 1, kind: input, shape index: {}]
  %s2 = inlined_call_operand.vmem [shape: f32[2,4,8,2], index: 2, kind: input, shape index: {}]
  %s3 = inlined_call_operand.vmem [shape: f32[3,8,8], index: 3, kind: input, shape index: {}]
  %s4 = inlined_call_operand.vmem [shape: f32[8,1], index: 4, kind: input, shape index: {}]
  %s5 = inlined_call_operand.vmem [shape: f32[8,8], index: 5, kind: input, shape index: {}]
  %s6 = inlined_call_operand.vmem [shape: f32[8,8], index: 6, kind: input, shape index: {}]
  %s7 = inlined_call_operand.vmem [shape: f32[8,1], index: 7, kind: input, shape index: {}]
  %s8 = inlined_call_operand.hbm [shape: f32[2,8,512], index: 8, kind: output, shape index: {}]
  %s9 = sld [smem:[#allocation0]]
  $region65: #{tpu_custom_call.1} parent=0
    _
  %s11 = ssub.s32 1, %s9
  %s12 = scalar_select 0, %s11, %s9
  $region1: #{tpu_custom_call.1} parent=0
    #allocation2 [shape = 'u8[8192]{0}', space=vmem, size = 0x2000, scoped, tag = 'output window, operand 0']
    #allocation3 [shape = 's32[2]{0}', space=sflag, size = 0x8, scoped, tag = 'scoped memory for tpu_custom_call.1']
    %13 = vsyncpa [#allocation3], 0
    %s14 = scalar_lea.sflag [#allocation3], 1
    %15 = vsyncpa %s14, 0
    loop: start=0, step=1, limit=10
    $region2: #{tpu_custom_call.1} parent=1 // loop_pre_header
      _
    $region3: #{tpu_custom_call.1} parent=1 // loop_header
      %s17 = sphi 0, %s21
      %p18 = scmp.ge.s32.totalorder %s17, 10
      %s24 = sphi 0, %s36
      %s25 = sphi 0, %s32
      %s26 = sphi 0, %s24
      %s27 = sphi 0, %s25
      %s28 = sphi 0, %s26
      %s29 = sphi 0, %s27
      %s41 = sphi 0, %s43
      %s44 = sphi 0, %s41
      %s45 = sphi 0, %s44
      %s61 = sphi 0, %s45
      %s69 = sphi 0, %s71
      %s72 = sphi 0, %s69
      %s73 = sphi 0, %s72
      %s89 = sphi 0, %s73
      %s97 = sphi 0, %s99
      %s100 = sphi 0, %s97
      %s101 = sphi 0, %s100
      %s117 = sphi 0, %s101
      %s121 = sphi 0, %s121
      %s123 = sphi 0, %s121
      %s124 = sphi 0, %s123
      %s138 = sphi 0, %s124
      %s142 = sphi 0, %s142
      %s144 = sphi 0, %s142
      %s145 = sphi 0, %s144
      %s159 = sphi 0, %s145
      %s163 = sphi 0, %s163
      %s165 = sphi 0, %s163
      %s166 = sphi 0, %s165
      %s180 = sphi 0, %s166
      %s184 = sphi 0, %s184
      %s186 = sphi 0, %s184
      %s187 = sphi 0, %s186
      %s201 = sphi 0, %s187
      %s205 = sphi 0, %s205
      %s207 = sphi 0, %s205
      %s208 = sphi 0, %s207
      %s222 = sphi 0, %s208
      %s230 = sphi 0, %s232
      %s233 = sphi 0, %s230
      %s234 = sphi 0, %s233
      %s250 = sphi 0, %s234
    $region4: #{tpu_custom_call.1} parent=1 // loop_header_branch
      %20 = sbr.rel (%p18) target = $region8
    $region5: #{tpu_custom_call.1} parent=1 // loop_body
      %s22 = ssub.s32 %s17, 1
      %s23 = ssub.s32 %s17, 2
      %s30 = sadd.s32 1, %s25
      %p31 = scmp.ge.s32.totalorder %s30, 4
      %s32 = scalar_select %p31, 0, %s30
      %s33 = sadd.s32 1, %s24
      %s34 = scalar_select %p31, %s33, %s24
      %p35 = scmp.ge.s32.totalorder %s34, 2
      %s36 = scalar_select %p35, 0, %s34
      %s37 = ssub.s32 %s24, %s36
      %s38 = ssub.s32 %s25, %s32
      %s39 = sor.u32 %s37, %s38
      %p40 = scmp.eq.s32.totalorder %s39, 0
      %s42 = sadd.s32 %s41, 1
      %s43 = scalar_select %p40, %s41, %s42
      %p46 = pneg %p40
      %p47 = scmp.eq.s32.totalorder %s17, 7
      %p48 = por %p46, %p47
      %p49 = scmp.ne.s32.totalorder %s41, %s44
      %p50 = scmp.eq.s32.totalorder %s17, 0
      %p51 = por %p49, %p50
      %p52 = scmp.ne.s32.totalorder %s41, %s44
      %p53 = scmp.eq.s32.totalorder %s22, 7
      %p54 = por %p52, %p53
      %p55 = scmp.ne.s32.totalorder %s44, %s45
      %p56 = scmp.eq.s32.totalorder %s22, 0
      %p57 = por %p55, %p56
      %p58 = scmp.ne.s32.totalorder %s44, %s45
      %p59 = scmp.eq.s32.totalorder %s23, 7
      %p60 = por %p58, %p59
      %p62 = scmp.ne.s32.totalorder %s45, %s61
      %p63 = scmp.eq.s32.totalorder %s23, 0
      %p64 = por %p62, %p63
      %s65 = ssub.s32 %s24, %s36
      %s66 = ssub.s32 %s25, %s32
      %s67 = sor.u32 %s65, %s66
      %p68 = scmp.eq.s32.totalorder %s67, 0
      %s70 = sadd.s32 %s69, 1
      %s71 = scalar_select %p68, %s69, %s70
      %p74 = pneg %p68
      %p75 = scmp.eq.s32.totalorder %s17, 7
      %p76 = por %p74, %p75
      %p77 = scmp.ne.s32.totalorder %s69, %s72
      %p78 = scmp.eq.s32.totalorder %s17, 0
      %p79 = por %p77, %p78
      %p80 = scmp.ne.s32.totalorder %s69, %s72
      %p81 = scmp.eq.s32.totalorder %s22, 7
      %p82 = por %p80, %p81
      %p83 = scmp.ne.s32.totalorder %s72, %s73
      %p84 = scmp.eq.s32.totalorder %s22, 0
      %p85 = por %p83, %p84
      %p86 = scmp.ne.s32.totalorder %s72, %s73
      %p87 = scmp.eq.s32.totalorder %s23, 7
      %p88 = por %p86, %p87
      %p90 = scmp.ne.s32.totalorder %s73, %s89
      %p91 = scmp.eq.s32.totalorder %s23, 0
      %p92 = por %p90, %p91
      %s93 = ssub.s32 %s24, %s36
      %s94 = ssub.s32 %s25, %s32
      %s95 = sor.u32 %s93, %s94
      %p96 = scmp.eq.s32.totalorder %s95, 0
      %s98 = sadd.s32 %s97, 1
      %s99 = scalar_select %p96, %s97, %s98
      %p102 = pneg %p96
      %p103 = scmp.eq.s32.totalorder %s17, 7
      %p104 = por %p102, %p103
      %p105 = scmp.ne.s32.totalorder %s97, %s100
      %p106 = scmp.eq.s32.totalorder %s17, 0
      %p107 = por %p105, %p106
      %p108 = scmp.ne.s32.totalorder %s97, %s100
      %p109 = scmp.eq.s32.totalorder %s22, 7
      %p110 = por %p108, %p109
      %p111 = scmp.ne.s32.totalorder %s100, %s101
      %p112 = scmp.eq.s32.totalorder %s22, 0
      %p113 = por %p111, %p112
      %p114 = scmp.ne.s32.totalorder %s100, %s101
      %p115 = scmp.eq.s32.totalorder %s23, 7
      %p116 = por %p114, %p115
      %p118 = scmp.ne.s32.totalorder %s101, %s117
      %p119 = scmp.eq.s32.totalorder %s23, 0
      %p120 = por %p118, %p119
      %s122 = sadd.s32 %s121, 1
      %p125 = scmp.eq.s32.totalorder %s17, 7
      %p126 = scmp.ne.s32.totalorder %s121, %s123
      %p127 = scmp.eq.s32.totalorder %s17, 0
      %p128 = por %p126, %p127
      %p129 = scmp.ne.s32.totalorder %s121, %s123
      %p130 = scmp.eq.s32.totalorder %s22, 7
      %p131 = por %p129, %p130
      %p132 = scmp.ne.s32.totalorder %s123, %s124
      %p133 = scmp.eq.s32.totalorder %s22, 0
      %p134 = por %p132, %p133
      %p135 = scmp.ne.s32.totalorder %s123, %s124
      %p136 = scmp.eq.s32.totalorder %s23, 7
      %p137 = por %p135, %p136
      %p139 = scmp.ne.s32.totalorder %s124, %s138
      %p140 = scmp.eq.s32.totalorder %s23, 0
      %p141 = por %p139, %p140
      %s143 = sadd.s32 %s142, 1
      %p146 = scmp.eq.s32.totalorder %s17, 7
      %p147 = scmp.ne.s32.totalorder %s142, %s144
      %p148 = scmp.eq.s32.totalorder %s17, 0
      %p149 = por %p147, %p148
      %p150 = scmp.ne.s32.totalorder %s142, %s144
      %p151 = scmp.eq.s32.totalorder %s22, 7
      %p152 = por %p150, %p151
      %p153 = scmp.ne.s32.totalorder %s144, %s145
      %p154 = scmp.eq.s32.totalorder %s22, 0
      %p155 = por %p153, %p154
      %p156 = scmp.ne.s32.totalorder %s144, %s145
      %p157 = scmp.eq.s32.totalorder %s23, 7
      %p158 = por %p156, %p157
      %p160 = scmp.ne.s32.totalorder %s145, %s159
      %p161 = scmp.eq.s32.totalorder %s23, 0
      %p162 = por %p160, %p161
      %s164 = sadd.s32 %s163, 1
      %p167 = scmp.eq.s32.totalorder %s17, 7
      %p168 = scmp.ne.s32.totalorder %s163, %s165
      %p169 = scmp.eq.s32.totalorder %s17, 0
      %p170 = por %p168, %p169
      %p171 = scmp.ne.s32.totalorder %s163, %s165
      %p172 = scmp.eq.s32.totalorder %s22, 7
      %p173 = por %p171, %p172
      %p174 = scmp.ne.s32.totalorder %s165, %s166
      %p175 = scmp.eq.s32.totalorder %s22, 0
      %p176 = por %p174, %p175
      %p177 = scmp.ne.s32.totalorder %s165, %s166
      %p178 = scmp.eq.s32.totalorder %s23, 7
      %p179 = por %p177, %p178
      %p181 = scmp.ne.s32.totalorder %s166, %s180
      %p182 = scmp.eq.s32.totalorder %s23, 0
      %p183 = por %p181, %p182
      %s185 = sadd.s32 %s184, 1
      %p188 = scmp.eq.s32.totalorder %s17, 7
      %p189 = scmp.ne.s32.totalorder %s184, %s186
      %p190 = scmp.eq.s32.totalorder %s17, 0
      %p191 = por %p189, %p190
      %p192 = scmp.ne.s32.totalorder %s184, %s186
      %p193 = scmp.eq.s32.totalorder %s22, 7
      %p194 = por %p192, %p193
      %p195 = scmp.ne.s32.totalorder %s186, %s187
      %p196 = scmp.eq.s32.totalorder %s22, 0
      %p197 = por %p195, %p196
      %p198 = scmp.ne.s32.totalorder %s186, %s187
      %p199 = scmp.eq.s32.totalorder %s23, 7
      %p200 = por %p198, %p199
      %p202 = scmp.ne.s32.totalorder %s187, %s201
      %p203 = scmp.eq.s32.totalorder %s23, 0
      %p204 = por %p202, %p203
      %s206 = sadd.s32 %s205, 1
      %p209 = scmp.eq.s32.totalorder %s17, 7
      %p210 = scmp.ne.s32.totalorder %s205, %s207
      %p211 = scmp.eq.s32.totalorder %s17, 0
      %p212 = por %p210, %p211
      %p213 = scmp.ne.s32.totalorder %s205, %s207
      %p214 = scmp.eq.s32.totalorder %s22, 7
      %p215 = por %p213, %p214
      %p216 = scmp.ne.s32.totalorder %s207, %s208
      %p217 = scmp.eq.s32.totalorder %s22, 0
      %p218 = por %p216, %p217
      %p219 = scmp.ne.s32.totalorder %s207, %s208
      %p220 = scmp.eq.s32.totalorder %s23, 7
      %p221 = por %p219, %p220
      %p223 = scmp.ne.s32.totalorder %s208, %s222
      %p224 = scmp.eq.s32.totalorder %s23, 0
      %p225 = por %p223, %p224
      %s226 = ssub.s32 %s24, %s36
      %s227 = ssub.s32 %s25, %s32
      %s228 = sor.u32 %s226, %s227
      %p229 = scmp.eq.s32.totalorder %s228, 0
      %s231 = sadd.s32 %s230, 1
      %s232 = scalar_select %p229, %s230, %s231
      %p235 = pneg %p229
      %p236 = scmp.eq.s32.totalorder %s17, 7
      %p237 = por %p235, %p236
      %p238 = scmp.ne.s32.totalorder %s230, %s233
      %p239 = scmp.eq.s32.totalorder %s17, 0
      %p240 = por %p238, %p239
      %p241 = scmp.ne.s32.totalorder %s230, %s233
      %p242 = scmp.eq.s32.totalorder %s22, 7
      %p243 = por %p241, %p242
      %p244 = scmp.ne.s32.totalorder %s233, %s234
      %p245 = scmp.eq.s32.totalorder %s22, 0
      %p246 = por %p244, %p245
      %p247 = scmp.ne.s32.totalorder %s233, %s234
      %p248 = scmp.eq.s32.totalorder %s23, 7
      %p249 = por %p247, %p248
      %p251 = scmp.ne.s32.totalorder %s234, %s250
      %p252 = scmp.eq.s32.totalorder %s23, 0
      %p253 = por %p251, %p252
      %p254 = scmp.le.s32.totalorder 1, %s17
      %p255 = scmp.lt.s32.totalorder %s17, 9
      %p256 = pnand %p254, %p255
      %p257 = pneg %p256
      // Predicated region
      $region9: #{tpu_custom_call.1} parent=5 // pred_check
        _
      $region10: #{tpu_custom_call.1} parent=5 // pred_check_branch
        %259 = sbr.rel (%p256) target = $region12
      $region11: #{tpu_custom_call.1} parent=5 // pred_region
        %s260 = ssub.s32 %s17, 1
        // Predicated region
        $region13: #{tpu_custom_call.1} parent=11 // pred_check
          %p261 = pneg %p134
        $region14: #{tpu_custom_call.1} parent=11 // pred_check_branch
          %263 = sbr.rel (%p261) target = $region16
        $region15: #{tpu_custom_call.1} parent=11 // pred_region
          _
        $region16: #{tpu_custom_call.1} parent=11 // pred_fallthru
          _
        // Predicated region
        $region17: #{tpu_custom_call.1} parent=11 // pred_check
          %p264 = pneg %p155
        $region18: #{tpu_custom_call.1} parent=11 // pred_check_branch
          %266 = sbr.rel (%p264) target = $region20
        $region19: #{tpu_custom_call.1} parent=11 // pred_region
          _
        $region20: #{tpu_custom_call.1} parent=11 // pred_fallthru
          _
        // Predicated region
        $region21: #{tpu_custom_call.1} parent=11 // pred_check
          %p267 = pneg %p176
        $region22: #{tpu_custom_call.1} parent=11 // pred_check_branch
          %269 = sbr.rel (%p267) target = $region24
        $region23: #{tpu_custom_call.1} parent=11 // pred_region
          _
        $region24: #{tpu_custom_call.1} parent=11 // pred_fallthru
          _
        // Predicated region
        $region25: #{tpu_custom_call.1} parent=11 // pred_check
          %p270 = pneg %p197
        $region26: #{tpu_custom_call.1} parent=11 // pred_check_branch
          %272 = sbr.rel (%p270) target = $region28
        $region27: #{tpu_custom_call.1} parent=11 // pred_region
          _
        $region28: #{tpu_custom_call.1} parent=11 // pred_fallthru
          _
        // Predicated region
        $region29: #{tpu_custom_call.1} parent=11 // pred_check
          %p273 = pneg %p218
        $region30: #{tpu_custom_call.1} parent=11 // pred_check_branch
          %275 = sbr.rel (%p273) target = $region32
        $region31: #{tpu_custom_call.1} parent=11 // pred_region
          _
        $region32: #{tpu_custom_call.1} parent=11 // pred_fallthru
          _
      $region12: #{tpu_custom_call.1} parent=5 // pred_fallthru
        _
      %p276 = scmp.lt.s32.totalorder %s17, 8
      // Predicated region
      $region33: #{tpu_custom_call.1} parent=5 // pred_check
        %p277 = pneg %p276
      $region34: #{tpu_custom_call.1} parent=5 // pred_check_branch
        %279 = sbr.rel (%p277) target = $region36
      $region35: #{tpu_custom_call.1} parent=5 // pred_region
        // Predicated region
        $region37: #{tpu_custom_call.1} parent=35 // pred_check
          %p280 = pneg %p51
        $region38: #{tpu_custom_call.1} parent=35 // pred_check_branch
          %282 = sbr.rel (%p280) target = $region40
        $region39: #{tpu_custom_call.1} parent=35 // pred_region
          %p283 = scmp.lt.s32.totalorder %s24, 1
          %s284 = scalar_select %p283, %s24, 1
          %p285 = scmp.lt.s32.totalorder %s25, 3
          %s286 = scalar_select %p285, %s25, 3
          %s287 = smul.addr %s284, 4
          %s288 = sadd.s32 %s286, %s287
          %s289 = smul.addr %s288, 8
          %s290 = scalar_lea.vmem %s0, %s289
        $region40: #{tpu_custom_call.1} parent=35 // pred_fallthru
          _
        // Predicated region
        $region41: #{tpu_custom_call.1} parent=35 // pred_check
          %p291 = pneg %p79
        $region42: #{tpu_custom_call.1} parent=35 // pred_check_branch
          %293 = sbr.rel (%p291) target = $region44
        $region43: #{tpu_custom_call.1} parent=35 // pred_region
          %p294 = scmp.lt.s32.totalorder %s24, 1
          %s295 = scalar_select %p294, %s24, 1
          %p296 = scmp.lt.s32.totalorder %s25, 3
          %s297 = scalar_select %p296, %s25, 3
          %s298 = smul.addr %s295, 4
          %s299 = sadd.s32 %s297, %s298
          %s300 = smul.addr %s299, 8
          %s301 = scalar_lea.vmem %s1, %s300
        $region44: #{tpu_custom_call.1} parent=35 // pred_fallthru
          _
        // Predicated region
        $region45: #{tpu_custom_call.1} parent=35 // pred_check
          %p302 = pneg %p107
        $region46: #{tpu_custom_call.1} parent=35 // pred_check_branch
          %304 = sbr.rel (%p302) target = $region48
        $region47: #{tpu_custom_call.1} parent=35 // pred_region
          %p305 = scmp.lt.s32.totalorder %s24, 1
          %s306 = scalar_select %p305, %s24, 1
          %p307 = scmp.lt.s32.totalorder %s25, 3
          %s308 = scalar_select %p307, %s25, 3
          %s309 = smul.addr %s306, 4
          %s310 = sadd.s32 %s308, %s309
          %s311 = smul.addr %s310, 8
          %s312 = scalar_lea.vmem %s2, %s311
        $region48: #{tpu_custom_call.1} parent=35 // pred_fallthru
          _
      $region36: #{tpu_custom_call.1} parent=5 // pred_fallthru
        _
      %p313 = scmp.le.s32.totalorder 1, %s17
      %p314 = scmp.lt.s32.totalorder %s17, 9
      %p315 = pnand %p313, %p314
      %p316 = pneg %p315
      // Predicated region
      $region49: #{tpu_custom_call.1} parent=5 // pred_check
        _
      $region50: #{tpu_custom_call.1} parent=5 // pred_check_branch
        %318 = sbr.rel (%p315) target = $region52
      $region51: #{tpu_custom_call.1} parent=5 // pred_region
        %s319 = ssub.s32 %s17, 1
        %p320 = scmp.lt.s32.totalorder %s26, 1
        %s321 = scalar_select %p320, %s26, 1
        %p322 = scmp.lt.s32.totalorder %s27, 3
        %s323 = scalar_select %p322, %s27, 3
        %s324 = smul.addr %s321, 4
        %s325 = sadd.s32 %s323, %s324
        %s326 = smul.addr %s325, 8
        %s327 = scalar_lea.vmem %s0, %s326
        %p328 = pneg %p57
        %p329 = pneg %p54
        %p330 = scmp.lt.s32.totalorder %s26, 1
        %s331 = scalar_select %p330, %s26, 1
        %p332 = scmp.lt.s32.totalorder %s27, 3
        %s333 = scalar_select %p332, %s27, 3
        %s334 = smul.addr %s331, 4
        %s335 = sadd.s32 %s333, %s334
        %s336 = smul.addr %s335, 8
        %s337 = scalar_lea.vmem %s1, %s336
        %p338 = pneg %p85
        %p339 = pneg %p82
        %p340 = scmp.lt.s32.totalorder %s26, 1
        %s341 = scalar_select %p340, %s26, 1
        %p342 = scmp.lt.s32.totalorder %s27, 3
        %s343 = scalar_select %p342, %s27, 3
        %s344 = smul.addr %s341, 4
        %s345 = sadd.s32 %s343, %s344
        %s346 = smul.addr %s345, 8
        %s347 = scalar_lea.vmem %s2, %s346
        %p348 = pneg %p113
        %p349 = pneg %p110
        %p350 = pneg %p134
        %p351 = pneg %p131
        %p352 = pneg %p155
        %p353 = pneg %p152
        %p354 = pneg %p176
        %p355 = pneg %p173
        %p356 = pneg %p197
        %p357 = pneg %p194
        %p358 = pneg %p218
        %p359 = pneg %p215
        %p360 = pneg %p246
        %p361 = pneg %p243
        %s362 = sand.u32 %s233, 1
        %s363 = scalar_lea.sflag [#allocation3], %s362
        %s364 = sand.u32 %s233, 1
        %s365 = smul.addr %s364, 8
        %s366 = scalar_lea.vmem [#allocation2], %s365
        %p367 = scmp.lt.s32.totalorder %s26, 1
        %s368 = scalar_select %p367, %s26, 1
        %p369 = scmp.lt.s32.totalorder %s27, 3
        %s370 = scalar_select %p369, %s27, 3
        %s371 = smul.addr %s368, 4
        %s372 = sadd.s32 %s370, %s371
        %s373 = smul.addr %s372, 8
        %s374 = scalar_lea.vmem %s0, %s373
        %p375 = scmp.lt.s32.totalorder %s26, 1
        %s376 = scalar_select %p375, %s26, 1
        %p377 = scmp.lt.s32.totalorder %s27, 3
        %s378 = scalar_select %p377, %s27, 3
        %s379 = smul.addr %s376, 4
        %s380 = sadd.s32 %s378, %s379
        %s381 = smul.addr %s380, 8
        %s382 = scalar_lea.vmem %s1, %s381
        %p383 = scmp.lt.s32.totalorder %s26, 1
        %s384 = scalar_select %p383, %s26, 1
        %p385 = scmp.lt.s32.totalorder %s27, 3
        %s386 = scalar_select %p385, %s27, 3
        %s387 = smul.addr %s384, 4
        %s388 = sadd.s32 %s386, %s387
        %s389 = smul.addr %s388, 8
        %s390 = scalar_lea.vmem %s2, %s389
        %v391 = vld [vmem:[%s374] sm:$0xff]
        %v392 = vld [vmem:[%s382] sm:$0xff]
        %v393 = vld [vmem:[%s390] sm:$0xff]
        %vm394 = vcmp.gt.f32.partialorder %v391, 0.0
        %v395 = vmul.f32 %v391, 0.2
        %v396 = vsel %vm394, %v391, %v395
        %vm397 = vcmp.gt.f32.partialorder %v392, 0.0
        %v398 = vmul.f32 %v392, 0.2
        %v399 = vsel %vm397, %v392, %v398
        %vm400 = vcmp.gt.f32.partialorder %v393, 0.0
        %v401 = vmul.f32 %v393, 0.2
        %v402 = vsel %vm400, %v393, %v401
        %404 = vrot.lane.b32.xlu0 %v396, 2
        %v405 = vpop.permute.xlu0 %404
        %vm407 = vcmask 15360
        %v408 = vsel %vm407, %v399, %v405
        %409 = vrot.lane.b32.xlu0 %v396, 126
        %v410 = vpop.permute.xlu0 %409
        %413 = vrot.lane.b32.xlu0 %v402, 126
        %v414 = vpop.permute.xlu0 %413
        %vm416 = vcmask 1031168
        %v417 = vsel %vm416, %v410, %v414
        %v418 = vld [vmem:[%s3] sm:$0xff]
        %s419 = scalar_lea.vmem %s3, 8
        %v420 = vld [vmem:[%s419] sm:$0xff]
        %vm421 = vcmask 64512
        %v423 = vsel %vm421, %v420, 0
        %425 = vmatprep.subr.mxu0 0.0
        %426 = vmatpush1.msra.mxu0 %v396
        %427 = vmatprep.subr.mxu0 0.0
        %428 = vmatpush1.msra.mxu0 0.0
        %429 = vmatprep.subr.mxu0 0.0
        %430 = vmatpush1.msra.mxu0 0.0
        %431 = vmatprep.subr.mxu0 0.0
        %432 = vmatpush1.msra.mxu0 0.0
        %433 = vmatprep.subr.mxu0 0.0
        %434 = vmatpush1.msra.mxu0 0.0
        %435 = vmatprep.subr.mxu0 0.0
        %436 = vmatpush1.msra.mxu0 0.0
        %437 = vmatprep.subr.mxu0 0.0
        %438 = vmatpush1.msra.mxu0 0.0
        %439 = vmatprep.subr.mxu0 0.0
        %440 = vmatpush1.msra.mxu0 0.0
        %441 = vmatprep.subr.mxu0 0.0
        %442 = vmatpush1.msra.mxu0 0.0
        %443 = vmatprep.subr.mxu0 0.0
        %444 = vmatpush1.msra.mxu0 0.0
        %445 = vmatprep.subr.mxu0 0.0
        %446 = vmatpush1.msra.mxu0 0.0
        %447 = vmatprep.subr.mxu0 0.0
        %448 = vmatpush1.msra.mxu0 0.0
        %449 = vmatprep.subr.mxu0 0.0
        %450 = vmatpush1.msra.mxu0 0.0
        %451 = vmatprep.subr.mxu0 0.0
        %452 = vmatpush1.msra.mxu0 0.0
        %453 = vmatprep.subr.mxu0 0.0
        %454 = vmatpush1.msra.mxu0 0.0
        %455 = vmatprep.subr.mxu0 0.0
        %456 = vmatpush1.msra.mxu0 0.0
        %457 = vmatprep.subr.mxu0 0.0
        %458 = vmatpush1.msra.mxu0 0.0
        %459 = vmatprep.subr.mxu0 0.0
        %460 = vmatpush1.msra.mxu0 0.0
        %461 = vmatprep.subr.mxu0 0.0
        %462 = vmatpush1.msra.mxu0 0.0
        %463 = vmatprep.subr.mxu0 0.0
        %464 = vmatpush1.msra.mxu0 0.0
        %465 = vmatprep.subr.mxu0 0.0
        %466 = vmatpush1.msra.mxu0 0.0
        %467 = vmatprep.subr.mxu0 0.0
        %468 = vmatpush1.msra.mxu0 0.0
        %469 = vmatprep.subr.mxu0 0.0
        %470 = vmatpush1.msra.mxu0 0.0
        %471 = vmatprep.subr.mxu0 0.0
        %472 = vmatpush1.msra.mxu0 0.0
        %473 = vmatprep.subr.mxu0 0.0
        %474 = vmatpush1.msra.mxu0 0.0
        %475 = vmatprep.subr.mxu0 0.0
        %476 = vmatpush1.msra.mxu0 0.0
        %477 = vmatprep.subr.mxu0 0.0
        %478 = vmatpush1.msra.mxu0 0.0
        %479 = vmatprep.subr.mxu0 0.0
        %480 = vmatpush1.msra.mxu0 0.0
        %481 = vmatprep.subr.mxu0 0.0
        %482 = vmatpush1.msra.mxu0 0.0
        %483 = vmatprep.subr.mxu0 0.0
        %484 = vmatpush1.msra.mxu0 0.0
        %485 = vmatprep.subr.mxu0 0.0
        %486 = vmatpush1.msra.mxu0 0.0
        %487 = vmatprep.subr.mxu0 0.0
        %488 = vmatpush1.msra.mxu0 0.0
        %489 = vmatprep.mubr.f32.mxu0 0.0
        %490 = vmatmul.mubr.f32.gmra.mrb[0].mxu0 %v423
        %v491 = vpop.f32.mrb[0].mxu0
        %v492 = vadd.f32 0.0, %v491
        %v493 = vpop.f32.mrb[0].mxu0
        %494 = vdwg.mxu0
        %v496 = vsel %vm421, %v418, 0
        %498 = vmatprep.subr.mxu0 0.0
        %499 = vmatpush1.msra.mxu0 %v408
        %500 = vmatprep.subr.mxu0 0.0
        %501 = vmatpush1.msra.mxu0 0.0
        %502 = vmatprep.subr.mxu0 0.0
        %503 = vmatpush1.msra.mxu0 0.0
        %504 = vmatprep.subr.mxu0 0.0
        %505 = vmatpush1.msra.mxu0 0.0
        %506 = vmatprep.subr.mxu0 0.0
        %507 = vmatpush1.msra.mxu0 0.0
        %508 = vmatprep.subr.mxu0 0.0
        %509 = vmatpush1.msra.mxu0 0.0
        %510 = vmatprep.subr.mxu0 0.0
        %511 = vmatpush1.msra.mxu0 0.0
        %512 = vmatprep.subr.mxu0 0.0
        %513 = vmatpush1.msra.mxu0 0.0
        %514 = vmatprep.subr.mxu0 0.0
        %515 = vmatpush1.msra.mxu0 0.0
        %516 = vmatprep.subr.mxu0 0.0
        %517 = vmatpush1.msra.mxu0 0.0
        %518 = vmatprep.subr.mxu0 0.0
        %519 = vmatpush1.msra.mxu0 0.0
        %520 = vmatprep.subr.mxu0 0.0
        %521 = vmatpush1.msra.mxu0 0.0
        %522 = vmatprep.subr.mxu0 0.0
        %523 = vmatpush1.msra.mxu0 0.0
        %524 = vmatprep.subr.mxu0 0.0
        %525 = vmatpush1.msra.mxu0 0.0
        %526 = vmatprep.subr.mxu0 0.0
        %527 = vmatpush1.msra.mxu0 0.0
        %528 = vmatprep.subr.mxu0 0.0
        %529 = vmatpush1.msra.mxu0 0.0
        %530 = vmatprep.subr.mxu0 0.0
        %531 = vmatpush1.msra.mxu0 0.0
        %532 = vmatprep.subr.mxu0 0.0
        %533 = vmatpush1.msra.mxu0 0.0
        %534 = vmatprep.subr.mxu0 0.0
        %535 = vmatpush1.msra.mxu0 0.0
        %536 = vmatprep.subr.mxu0 0.0
        %537 = vmatpush1.msra.mxu0 0.0
        %538 = vmatprep.subr.mxu0 0.0
        %539 = vmatpush1.msra.mxu0 0.0
        %540 = vmatprep.subr.mxu0 0.0
        %541 = vmatpush1.msra.mxu0 0.0
        %542 = vmatprep.subr.mxu0 0.0
        %543 = vmatpush1.msra.mxu0 0.0
        %544 = vmatprep.subr.mxu0 0.0
        %545 = vmatpush1.msra.mxu0 0.0
        %546 = vmatprep.subr.mxu0 0.0
        %547 = vmatpush1.msra.mxu0 0.0
        %548 = vmatprep.subr.mxu0 0.0
        %549 = vmatpush1.msra.mxu0 0.0
        %550 = vmatprep.subr.mxu0 0.0
        %551 = vmatpush1.msra.mxu0 0.0
        %552 = vmatprep.subr.mxu0 0.0
        %553 = vmatpush1.msra.mxu0 0.0
        %554 = vmatprep.subr.mxu0 0.0
        %555 = vmatpush1.msra.mxu0 0.0
        %556 = vmatprep.subr.mxu0 0.0
        %557 = vmatpush1.msra.mxu0 0.0
        %558 = vmatprep.subr.mxu0 0.0
        %559 = vmatpush1.msra.mxu0 0.0
        %560 = vmatprep.subr.mxu0 0.0
        %561 = vmatpush1.msra.mxu0 0.0
        %562 = vmatprep.mubr.f32.mxu0 0.0
        %563 = vmatmul.mubr.f32.gmra.mrb[0].mxu0 %v496
        %v564 = vpop.f32.mrb[0].mxu0
        %v565 = vadd.f32 %v492, %v564
        %v566 = vpop.f32.mrb[0].mxu0
        %567 = vdwg.mxu0
        %s568 = scalar_lea.vmem %s3, 16
        %v569 = vld [vmem:[%s568] sm:$0xff]
        %v571 = vsel %vm421, %v569, 0
        %573 = vmatprep.subr.mxu0 0.0
        %574 = vmatpush1.msra.mxu0 %v417
        %575 = vmatprep.subr.mxu0 0.0
        %576 = vmatpush1.msra.mxu0 0.0
        %577 = vmatprep.subr.mxu0 0.0
        %578 = vmatpush1.msra.mxu0 0.0
        %579 = vmatprep.subr.mxu0 0.0
        %580 = vmatpush1.msra.mxu0 0.0
        %581 = vmatprep.subr.mxu0 0.0
        %582 = vmatpush1.msra.mxu0 0.0
        %583 = vmatprep.subr.mxu0 0.0
        %584 = vmatpush1.msra.mxu0 0.0
        %585 = vmatprep.subr.mxu0 0.0
        %586 = vmatpush1.msra.mxu0 0.0
        %587 = vmatprep.subr.mxu0 0.0
        %588 = vmatpush1.msra.mxu0 0.0
        %589 = vmatprep.subr.mxu0 0.0
        %590 = vmatpush1.msra.mxu0 0.0
        %591 = vmatprep.subr.mxu0 0.0
        %592 = vmatpush1.msra.mxu0 0.0
        %593 = vmatprep.subr.mxu0 0.0
        %594 = vmatpush1.msra.mxu0 0.0
        %595 = vmatprep.subr.mxu0 0.0
        %596 = vmatpush1.msra.mxu0 0.0
        %597 = vmatprep.subr.mxu0 0.0
        %598 = vmatpush1.msra.mxu0 0.0
        %599 = vmatprep.subr.mxu0 0.0
        %600 = vmatpush1.msra.mxu0 0.0
        %601 = vmatprep.subr.mxu0 0.0
        %602 = vmatpush1.msra.mxu0 0.0
        %603 = vmatprep.subr.mxu0 0.0
        %604 = vmatpush1.msra.mxu0 0.0
        %605 = vmatprep.subr.mxu0 0.0
        %606 = vmatpush1.msra.mxu0 0.0
        %607 = vmatprep.subr.mxu0 0.0
        %608 = vmatpush1.msra.mxu0 0.0
        %609 = vmatprep.subr.mxu0 0.0
        %610 = vmatpush1.msra.mxu0 0.0
        %611 = vmatprep.subr.mxu0 0.0
        %612 = vmatpush1.msra.mxu0 0.0
        %613 = vmatprep.subr.mxu0 0.0
        %614 = vmatpush1.msra.mxu0 0.0
        %615 = vmatprep.subr.mxu0 0.0
        %616 = vmatpush1.msra.mxu0 0.0
        %617 = vmatprep.subr.mxu0 0.0
        %618 = vmatpush1.msra.mxu0 0.0
        %619 = vmatprep.subr.mxu0 0.0
        %620 = vmatpush1.msra.mxu0 0.0
        %621 = vmatprep.subr.mxu0 0.0
        %622 = vmatpush1.msra.mxu0 0.0
        %623 = vmatprep.subr.mxu0 0.0
        %624 = vmatpush1.msra.mxu0 0.0
        %625 = vmatprep.subr.mxu0 0.0
        %626 = vmatpush1.msra.mxu0 0.0
        %627 = vmatprep.subr.mxu0 0.0
        %628 = vmatpush1.msra.mxu0 0.0
        %629 = vmatprep.subr.mxu0 0.0
        %630 = vmatpush1.msra.mxu0 0.0
        %631 = vmatprep.subr.mxu0 0.0
        %632 = vmatpush1.msra.mxu0 0.0
        %633 = vmatprep.subr.mxu0 0.0
        %634 = vmatpush1.msra.mxu0 0.0
        %635 = vmatprep.subr.mxu0 0.0
        %636 = vmatpush1.msra.mxu0 0.0
        %637 = vmatprep.mubr.f32.mxu0 0.0
        %638 = vmatmul.mubr.f32.gmra.mrb[0].mxu0 %v571
        %v639 = vpop.f32.mrb[0].mxu0
        %v640 = vadd.f32 0.0, %v639
        %v641 = vpop.f32.mrb[0].mxu0
        %642 = vdwg.mxu0
        %v643 = vadd.f32 %v565, %v640
        %v644 = vld [vmem:[%s4] sm:$0xff]
        %646 = vset.pattern.permute.xlu0 0
        %647 = vperm.xlu0 %646, %v644
        %v648 = vpop.permute.xlu0 %647
        %v650 = vadd.f32 %v643, %v648
        %vm651 = vcmp.gt.f32.partialorder %v650, 0.0
        %v652 = vmul.f32 %v650, 0.2
        %v653 = vsel %vm651, %v650, %v652
        %v654 = vld [vmem:[%s5] sm:$0xff]
        %v655 = vld [vmem:[%s6] sm:$0xff]
        %v657 = vsel %vm421, %v655, 0
        %659 = vmatprep.subr.mxu0 0.0
        %660 = vmatpush1.msra.mxu0 %v653
        %661 = vmatprep.subr.mxu0 0.0
        %662 = vmatpush1.msra.mxu0 0.0
        %663 = vmatprep.subr.mxu0 0.0
        %664 = vmatpush1.msra.mxu0 0.0
        %665 = vmatprep.subr.mxu0 0.0
        %666 = vmatpush1.msra.mxu0 0.0
        %667 = vmatprep.subr.mxu0 0.0
        %668 = vmatpush1.msra.mxu0 0.0
        %669 = vmatprep.subr.mxu0 0.0
        %670 = vmatpush1.msra.mxu0 0.0
        %671 = vmatprep.subr.mxu0 0.0
        %672 = vmatpush1.msra.mxu0 0.0
        %673 = vmatprep.subr.mxu0 0.0
        %674 = vmatpush1.msra.mxu0 0.0
        %675 = vmatprep.subr.mxu0 0.0
        %676 = vmatpush1.msra.mxu0 0.0
        %677 = vmatprep.subr.mxu0 0.0
        %678 = vmatpush1.msra.mxu0 0.0
        %679 = vmatprep.subr.mxu0 0.0
        %680 = vmatpush1.msra.mxu0 0.0
        %681 = vmatprep.subr.mxu0 0.0
        %682 = vmatpush1.msra.mxu0 0.0
        %683 = vmatprep.subr.mxu0 0.0
        %684 = vmatpush1.msra.mxu0 0.0
        %685 = vmatprep.subr.mxu0 0.0
        %686 = vmatpush1.msra.mxu0 0.0
        %687 = vmatprep.subr.mxu0 0.0
        %688 = vmatpush1.msra.mxu0 0.0
        %689 = vmatprep.subr.mxu0 0.0
        %690 = vmatpush1.msra.mxu0 0.0
        %691 = vmatprep.subr.mxu0 0.0
        %692 = vmatpush1.msra.mxu0 0.0
        %693 = vmatprep.subr.mxu0 0.0
        %694 = vmatpush1.msra.mxu0 0.0
        %695 = vmatprep.subr.mxu0 0.0
        %696 = vmatpush1.msra.mxu0 0.0
        %697 = vmatprep.subr.mxu0 0.0
        %698 = vmatpush1.msra.mxu0 0.0
        %699 = vmatprep.subr.mxu0 0.0
        %700 = vmatpush1.msra.mxu0 0.0
        %701 = vmatprep.subr.mxu0 0.0
        %702 = vmatpush1.msra.mxu0 0.0
        %703 = vmatprep.subr.mxu0 0.0
        %704 = vmatpush1.msra.mxu0 0.0
        %705 = vmatprep.subr.mxu0 0.0
        %706 = vmatpush1.msra.mxu0 0.0
        %707 = vmatprep.subr.mxu0 0.0
        %708 = vmatpush1.msra.mxu0 0.0
        %709 = vmatprep.subr.mxu0 0.0
        %710 = vmatpush1.msra.mxu0 0.0
        %711 = vmatprep.subr.mxu0 0.0
        %712 = vmatpush1.msra.mxu0 0.0
        %713 = vmatprep.subr.mxu0 0.0
        %714 = vmatpush1.msra.mxu0 0.0
        %715 = vmatprep.subr.mxu0 0.0
        %716 = vmatpush1.msra.mxu0 0.0
        %717 = vmatprep.subr.mxu0 0.0
        %718 = vmatpush1.msra.mxu0 0.0
        %719 = vmatprep.subr.mxu0 0.0
        %720 = vmatpush1.msra.mxu0 0.0
        %721 = vmatprep.subr.mxu0 0.0
        %722 = vmatpush1.msra.mxu0 0.0
        %723 = vmatprep.mubr.f32.mxu0 0.0
        %724 = vmatmul.mubr.f32.gmra.mrb[0].mxu0 %v657
        %v725 = vpop.f32.mrb[0].mxu0
        %v726 = vadd.f32 0.0, %v725
        %v727 = vpop.f32.mrb[0].mxu0
        %728 = vdwg.mxu0
        %v730 = vsel %vm421, %v654, 0
        %732 = vmatprep.subr.mxu0 0.0
        %733 = vmatpush1.msra.mxu0 %v391
        %734 = vmatprep.subr.mxu0 0.0
        %735 = vmatpush1.msra.mxu0 0.0
        %736 = vmatprep.subr.mxu0 0.0
        %737 = vmatpush1.msra.mxu0 0.0
        %738 = vmatprep.subr.mxu0 0.0
        %739 = vmatpush1.msra.mxu0 0.0
        %740 = vmatprep.subr.mxu0 0.0
        %741 = vmatpush1.msra.mxu0 0.0
        %742 = vmatprep.subr.mxu0 0.0
        %743 = vmatpush1.msra.mxu0 0.0
        %744 = vmatprep.subr.mxu0 0.0
        %745 = vmatpush1.msra.mxu0 0.0
        %746 = vmatprep.subr.mxu0 0.0
        %747 = vmatpush1.msra.mxu0 0.0
        %748 = vmatprep.subr.mxu0 0.0
        %749 = vmatpush1.msra.mxu0 0.0
        %750 = vmatprep.subr.mxu0 0.0
        %751 = vmatpush1.msra.mxu0 0.0
        %752 = vmatprep.subr.mxu0 0.0
        %753 = vmatpush1.msra.mxu0 0.0
        %754 = vmatprep.subr.mxu0 0.0
        %755 = vmatpush1.msra.mxu0 0.0
        %756 = vmatprep.subr.mxu0 0.0
        %757 = vmatpush1.msra.mxu0 0.0
        %758 = vmatprep.subr.mxu0 0.0
        %759 = vmatpush1.msra.mxu0 0.0
        %760 = vmatprep.subr.mxu0 0.0
        %761 = vmatpush1.msra.mxu0 0.0
        %762 = vmatprep.subr.mxu0 0.0
        %763 = vmatpush1.msra.mxu0 0.0
        %764 = vmatprep.subr.mxu0 0.0
        %765 = vmatpush1.msra.mxu0 0.0
        %766 = vmatprep.subr.mxu0 0.0
        %767 = vmatpush1.msra.mxu0 0.0
        %768 = vmatprep.subr.mxu0 0.0
        %769 = vmatpush1.msra.mxu0 0.0
        %770 = vmatprep.subr.mxu0 0.0
        %771 = vmatpush1.msra.mxu0 0.0
        %772 = vmatprep.subr.mxu0 0.0
        %773 = vmatpush1.msra.mxu0 0.0
        %774 = vmatprep.subr.mxu0 0.0
        %775 = vmatpush1.msra.mxu0 0.0
        %776 = vmatprep.subr.mxu0 0.0
        %777 = vmatpush1.msra.mxu0 0.0
        %778 = vmatprep.subr.mxu0 0.0
        %779 = vmatpush1.msra.mxu0 0.0
        %780 = vmatprep.subr.mxu0 0.0
        %781 = vmatpush1.msra.mxu0 0.0
        %782 = vmatprep.subr.mxu0 0.0
        %783 = vmatpush1.msra.mxu0 0.0
        %784 = vmatprep.subr.mxu0 0.0
        %785 = vmatpush1.msra.mxu0 0.0
        %786 = vmatprep.subr.mxu0 0.0
        %787 = vmatpush1.msra.mxu0 0.0
        %788 = vmatprep.subr.mxu0 0.0
        %789 = vmatpush1.msra.mxu0 0.0
        %790 = vmatprep.subr.mxu0 0.0
        %791 = vmatpush1.msra.mxu0 0.0
        %792 = vmatprep.subr.mxu0 0.0
        %793 = vmatpush1.msra.mxu0 0.0
        %794 = vmatprep.subr.mxu0 0.0
        %795 = vmatpush1.msra.mxu0 0.0
        %796 = vmatprep.mubr.f32.mxu0 0.0
        %797 = vmatmul.mubr.f32.gmra.mrb[0].mxu0 %v730
        %v798 = vpop.f32.mrb[0].mxu0
        %v799 = vadd.f32 %v726, %v798
        %v800 = vpop.f32.mrb[0].mxu0
        %801 = vdwg.mxu0
        %v802 = vld [vmem:[%s7] sm:$0xff]
        %804 = vset.pattern.permute.xlu0 0
        %805 = vperm.xlu0 %804, %v802
        %v806 = vpop.permute.xlu0 %805
        %v808 = vadd.f32 %v799, %v806
        %809 = vst [vmem:[%s366] sm:$0xff] %v808
        %s810 = sand.u32 %s233, 1
        %s811 = scalar_lea.sflag [#allocation3], %s810
        %s812 = sand.u32 %s233, 1
        %s813 = smul.addr %s812, 8
        %s814 = scalar_lea.vmem [#allocation2], %s813
        // Predicated region
        $region53: #{tpu_custom_call.1} parent=51 // pred_check
          %p815 = pneg %p243
        $region54: #{tpu_custom_call.1} parent=51 // pred_check_branch
          %817 = sbr.rel (%p815) target = $region56
        $region55: #{tpu_custom_call.1} parent=51 // pred_region
          %s819 = ssub.s32 128, 128
          %820 = vsyncadd %s811, %s819
          %s821 = smul.addr %s26, 4
          %s822 = sadd.s32 %s27, %s821
          %s823 = smul.addr %s822, 128
          %s824 = scalar_lea.hbm %s8, %s823
          %s826 = sshll.u32 %s814, 4
          %s827 = int_to_ptr.vmem [resolvable:$true] %s826
          %829 = dma.vmem_to_hbm [thread:$0]  %s827, 128, %s824, %s811
        $region56: #{tpu_custom_call.1} parent=51 // pred_fallthru
          _
      $region52: #{tpu_custom_call.1} parent=5 // pred_fallthru
        _
      %p830 = scmp.le.s32.totalorder 2, %s17
      // Predicated region
      $region57: #{tpu_custom_call.1} parent=5 // pred_check
        %p831 = pneg %p830
      $region58: #{tpu_custom_call.1} parent=5 // pred_check_branch
        %833 = sbr.rel (%p831) target = $region60
      $region59: #{tpu_custom_call.1} parent=5 // pred_region
        %s834 = ssub.s32 %s17, 2
        // Predicated region
        $region61: #{tpu_custom_call.1} parent=59 // pred_check
          %p835 = pneg %p249
        $region62: #{tpu_custom_call.1} parent=59 // pred_check_branch
          %837 = sbr.rel (%p835) target = $region64
        $region63: #{tpu_custom_call.1} parent=59 // pred_region
          %s838 = sand.u32 %s234, 1
          %s839 = scalar_lea.sflag [#allocation3], %s838
          %s840 = sand.u32 %s234, 1
          %s841 = smul.addr %s840, 8
          %s842 = scalar_lea.vmem [#allocation2], %s841
          %843 = dma.done %s839, 128
        $region64: #{tpu_custom_call.1} parent=59 // pred_fallthru
          _
      $region60: #{tpu_custom_call.1} parent=5 // pred_fallthru
        _
    $region6: #{tpu_custom_call.1} parent=1 // loop_footer
      %s21 = sadd.s32 1, %s17
    $region7: #{tpu_custom_call.1} parent=1 // loop_footer_branch
      %16 = sbr.rel target = $region3
    $region8: #{tpu_custom_call.1} parent=1 // loop_exit
      _
    %844 = vsyncpa [#allocation3], 1
    %s845 = scalar_lea.sflag [#allocation3], 1
    %846 = vsyncpa %s845, 1

</llo_original>
